<compile_context>
chip_gen: v5e
topology: v5e:2x2
jax: 0.10.0
libtpu: 0.0.40
codegen_flags: <defaults>
</compile_context>

<pallas_src>
import math

import jax
import jax.numpy as jnp
from jax.experimental import pallas as pl
from jax.experimental.pallas import tpu as pltpu

_EPS = 1e-5                       # nn.BatchNorm1d default eps
_TARGET_TILE_BYTES = 4 << 20      # per-step input-tile target (in input dtype)
_MIN_TILE_BYTES = 512 << 10       # don't shrink tiles below this just to add steps
_MIN_TOTAL_STEPS = 8              # soft target for pipelining / megacore
_VMEM_LIMIT_BYTES = 40 * 1024 * 1024


def _gbn_kernel(x_ref, gamma_ref, beta_ref, o_ref):
    # x_ref: (cps, vbs, tile_d) -- cps whole virtual batches, one feature tile.
    x = x_ref[...].astype(jnp.float32)
    inv_n = jnp.float32(1.0 / x.shape[1])

    # Two-pass statistics over the virtual-batch axis (axis=1); numerically
    # matches PyTorch's E[(x-mean)^2] form (no E[x^2]-mean^2 cancellation).
    mean = jnp.sum(x, axis=1, keepdims=True) * inv_n           # (cps, 1, tile_d)
    centered = x - mean
    var = jnp.sum(centered * centered, axis=1, keepdims=True) * inv_n
    inv_std = jax.lax.rsqrt(var + _EPS)                        # EUP slot

    g = gamma_ref[...].astype(jnp.float32)                     # (1, tile_d)
    b = beta_ref[...].astype(jnp.float32)                      # (1, tile_d)

    scale = inv_std * g                                        # (cps, 1, tile_d)
    o_ref[...] = (centered * scale + b).astype(o_ref.dtype)


def _pick_feature_tile(D, vbs, itemsize, target_bytes):
    """Feature-tile width.

    Prefer the full feature width (fully contiguous HBM slabs) whenever one
    virtual batch (vbs, D) fits the per-step budget.  For wide, 128-divisible
    D pick the largest 128-multiple divisor that fits.  For wide,
    non-128-divisible D fall back to a 128-multiple tile (Pallas masks the
    tail block) so a single block can never exceed VMEM.
    """
    if D <= 128 or vbs * D * itemsize <= target_bytes:
        return D
    max_w = max(128, ((target_bytes // (vbs * itemsize)) // 128) * 128)
    if D % 128 == 0:
        w = (min(D, max_w) // 128) * 128
        while w > 128 and D % w != 0:
            w -= 128
        return max(w, 128)
    # Wide, non-128-divisible D: lane-dense tile with a masked tail block.
    return min(max_w, ((D + 127) // 128) * 128)


def _next_divisor_down(n, c):
    c -= 1
    while c > 1 and n % c != 0:
        c -= 1
    return max(c, 1)


def _pick_chunks_per_step(num_chunks, vbs, tile_d, itemsize, n_feat_tiles,
                          target_bytes=_TARGET_TILE_BYTES,
                          min_tile_bytes=_MIN_TILE_BYTES,
                          min_total_steps=_MIN_TOTAL_STEPS):
    """Virtual batches per grid step: big tiles, but enough grid steps."""
    chunk_bytes = max(1, vbs * tile_d * itemsize)
    cps = max(1, min(num_chunks, target_bytes // chunk_bytes))
    while num_chunks % cps != 0:
        cps -= 1

    def total_steps(c):
        return (num_chunks // c) * n_feat_tiles

    # Keep enough steps for DMA/compute overlap and (v7x) megacore sharding,
    # but never shrink tiles below ~min_tile_bytes just to add steps beyond 2.
    while cps > 1 and total_steps(cps) < min_total_steps:
        cand = _next_divisor_down(num_chunks, cps)
        if total_steps(cps) >= 2 and cand * chunk_bytes < min_tile_bytes:
            break
        cps = cand
    return cps


def ghost_batch_norm(x, gamma, beta, *, virtual_batch_size=128):
    """Forward pass of GhostBatchNorm (training-mode statistics).

    x:     (B, D)
    gamma: (D,) or (1, D)  -- BatchNorm weight
    beta:  (D,) or (1, D)  -- BatchNorm bias
    """
    B, D = x.shape
    gamma = jnp.reshape(gamma, (1, D))
    beta = jnp.reshape(beta, (1, D))

    num_chunks = int(math.ceil(B / virtual_batch_size))
    # TODO(synk): ragged final virtual batch (B % num_chunks != 0) not handled;
    # torch.chunk would yield a smaller last chunk with its own statistics.
    assert B % num_chunks == 0, "batch must split evenly into virtual batches"
    vbs = B // num_chunks
    itemsize = jnp.dtype(x.dtype).itemsize

    tile_d = _pick_feature_tile(D, vbs, itemsize, _TARGET_TILE_BYTES)
    n_feat_tiles = pl.cdiv(D, tile_d)
    cps = _pick_chunks_per_step(num_chunks, vbs, tile_d, itemsize, n_feat_tiles)

    # (num_chunks, vbs, D) view: block second-to-last dim == full vbs (always
    # satisfies the (8,128) rule); last dim is full D or a 128-multiple.
    x3 = x.reshape(num_chunks, vbs, D)
    # Feature axis OUTER so gamma/beta block indices are constant across the
    # inner (chunk-group) loop and Pallas keeps them resident.
    grid = (n_feat_tiles, num_chunks // cps)

    out3 = pl.pallas_call(
        _gbn_kernel,
        out_shape=jax.ShapeDtypeStruct((num_chunks, vbs, D), x.dtype),
        grid_spec=pltpu.PrefetchScalarGridSpec(
            num_scalar_prefetch=0,
            grid=grid,
            in_specs=[
                pl.BlockSpec((cps, vbs, tile_d), lambda j, i: (i, 0, j)),  # x
                pl.BlockSpec((1, tile_d), lambda j, i: (0, j)),            # gamma
                pl.BlockSpec((1, tile_d), lambda j, i: (0, j)),            # beta
            ],
            out_specs=pl.BlockSpec((cps, vbs, tile_d), lambda j, i: (i, 0, j)),
        ),
        compiler_params=pltpu.CompilerParams(
            dimension_semantics=("parallel", "parallel"),
            vmem_limit_bytes=_VMEM_LIMIT_BYTES,
        ),
    )(x3, gamma, beta)

    return out3.reshape(B, D)


def _reference(x, gamma, beta, virtual_batch_size):
    """Pure-JAX reference: per-virtual-batch BatchNorm1d (training stats)."""
    B, D = x.shape
    num_chunks = int(math.ceil(B / virtual_batch_size))
    gamma = jnp.reshape(gamma, (1, D)).astype(jnp.float32)
    beta = jnp.reshape(beta, (1, D)).astype(jnp.float32)
    outs = []
    for c in jnp.split(x.astype(jnp.float32), num_chunks, axis=0):
        m = c.mean(axis=0, keepdims=True)
        v = ((c - m) ** 2).mean(axis=0, keepdims=True)
        outs.append((c - m) / jnp.sqrt(v + _EPS) * gamma + beta)
    return jnp.concatenate(outs, axis=0)


# TODO(synk): running_mean/running_var momentum updates and eval-mode
# normalization are not implemented (forward output in training mode only).

if __name__ == "__main__":
    key = jax.random.PRNGKey(0)
    k1, k2, k3 = jax.random.split(key, 3)

    # Case 1: small demo, D < 128 (feature dim kept whole; masked-store path).
    B, D, vbs = 16, 32, 8
    x = jax.random.normal(k1, (B, D), dtype=jnp.float32)
    gamma = jnp.ones((1, D), dtype=jnp.float32)   # BatchNorm1d init: weight=1
    beta = jnp.zeros((1, D), dtype=jnp.float32)   # BatchNorm1d init: bias=0
    out = jax.block_until_ready(ghost_batch_norm(x, gamma, beta, virtual_batch_size=vbs))
    expected = _reference(x, gamma, beta, vbs)
    assert out.shape == (B, D)
    assert jnp.allclose(out, expected, atol=1e-4, rtol=1e-4)

    # Case 2: 128-divisible feature dim, multiple virtual batches per step.
    B2, D2, vbs2 = 32, 256, 8
    x2 = jax.random.normal(k2, (B2, D2), dtype=jnp.float32)
    gamma2 = jax.random.normal(jax.random.PRNGKey(1), (1, D2), dtype=jnp.float32)
    beta2 = jax.random.normal(jax.random.PRNGKey(2), (1, D2), dtype=jnp.float32)
    out2 = jax.block_until_ready(ghost_batch_norm(x2, gamma2, beta2, virtual_batch_size=vbs2))
    expected2 = _reference(x2, gamma2, beta2, vbs2)
    assert out2.shape == (B2, D2)
    assert jnp.allclose(out2, expected2, atol=1e-4, rtol=1e-4)

    # Case 3: bf16 input/output (exercises dtype-aware tile sizing; f32 stats).
    B3, D3, vbs3 = 64, 128, 16
    x3 = jax.random.normal(k3, (B3, D3), dtype=jnp.float32).astype(jnp.bfloat16)
    gamma3 = jnp.ones((1, D3), dtype=jnp.bfloat16)
    beta3 = jnp.zeros((1, D3), dtype=jnp.bfloat16)
    out3 = jax.block_until_ready(ghost_batch_norm(x3, gamma3, beta3, virtual_batch_size=vbs3))
    expected3 = _reference(x3, gamma3, beta3, vbs3)
    assert out3.shape == (B3, D3)
    assert jnp.allclose(out3.astype(jnp.float32), expected3, atol=5e-2, rtol=5e-2)

    print("KERNEL_OK")
</pallas_src>

<mosaic_0001>
module attributes {stable_mosaic.version = 11 : i64} {
  func.func @_gbn_kernel(%arg0: i32, %arg1: i32, %arg2: memref<1x8x32xf32, #tpu.memory_space<vmem>>, %arg3: memref<1x32xf32, #tpu.memory_space<vmem>>, %arg4: memref<1x32xf32, #tpu.memory_space<vmem>>, %arg5: memref<1x8x32xf32, #tpu.memory_space<vmem>>) attributes {dimension_semantics = [#tpu.dimension_semantics<parallel>, #tpu.dimension_semantics<parallel>], iteration_bounds = array<i64: 1, 2>, scalar_prefetch = 0 : i64, scratch_operands = 0 : i64, tpu.core_type = #tpu.core_type<tc>, window_params = [{transform_indices = @transform_0, window_bounds = array<i64: 1, 8, 32>}, {transform_indices = @transform_1, window_bounds = array<i64: 1, 32>}, {transform_indices = @transform_2, window_bounds = array<i64: 1, 32>}, {transform_indices = @transform_3, window_bounds = array<i64: 1, 8, 32>}]} {
    %c0 = arith.constant 0 : index
    %c0_0 = arith.constant 0 : index
    %c0_1 = arith.constant 0 : index
    %0 = vector.load %arg2[%c0, %c0_0, %c0_1] : memref<1x8x32xf32, #tpu.memory_space<vmem>>, vector<1x8x32xf32>
    %cst = arith.constant dense<0.000000e+00> : vector<1x32xf32>
    %1 = vector.multi_reduction <add>, %0, %cst [1] : vector<1x8x32xf32> to vector<1x32xf32>
    %2 = vector.shape_cast %1 : vector<1x32xf32> to vector<1x1x32xf32>
    %cst_2 = arith.constant 1.250000e-01 : f32
    %3 = vector.broadcast %cst_2 : f32 to vector<1x1x32xf32>
    %4 = arith.mulf %2, %3 : vector<1x1x32xf32>
    %5 = vector.broadcast %4 : vector<1x1x32xf32> to vector<1x8x32xf32>
    %6 = arith.subf %0, %5 : vector<1x8x32xf32>
    %7 = arith.mulf %6, %6 : vector<1x8x32xf32>
    %cst_3 = arith.constant dense<0.000000e+00> : vector<1x32xf32>
    %8 = vector.multi_reduction <add>, %7, %cst_3 [1] : vector<1x8x32xf32> to vector<1x32xf32>
    %9 = vector.shape_cast %8 : vector<1x32xf32> to vector<1x1x32xf32>
    %cst_4 = arith.constant 1.250000e-01 : f32
    %10 = vector.broadcast %cst_4 : f32 to vector<1x1x32xf32>
    %11 = arith.mulf %9, %10 : vector<1x1x32xf32>
    %cst_5 = arith.constant 9.99999974E-6 : f32
    %12 = vector.broadcast %cst_5 : f32 to vector<1x1x32xf32>
    %13 = arith.addf %11, %12 : vector<1x1x32xf32>
    %14 = math.rsqrt %13 : vector<1x1x32xf32>
    %c0_6 = arith.constant 0 : index
    %c0_7 = arith.constant 0 : index
    %15 = vector.load %arg3[%c0_6, %c0_7] : memref<1x32xf32, #tpu.memory_space<vmem>>, vector<1x32xf32>
    %c0_8 = arith.constant 0 : index
    %c0_9 = arith.constant 0 : index
    %16 = vector.load %arg4[%c0_8, %c0_9] : memref<1x32xf32, #tpu.memory_space<vmem>>, vector<1x32xf32>
    %17 = vector.shape_cast %15 : vector<1x32xf32> to vector<1x1x32xf32>
    %18 = arith.mulf %14, %17 : vector<1x1x32xf32>
    %19 = vector.broadcast %18 : vector<1x1x32xf32> to vector<1x8x32xf32>
    %20 = arith.mulf %6, %19 : vector<1x8x32xf32>
    %21 = vector.shape_cast %16 : vector<1x32xf32> to vector<1x1x32xf32>
    %22 = vector.broadcast %21 : vector<1x1x32xf32> to vector<1x8x32xf32>
    %23 = arith.addf %20, %22 : vector<1x8x32xf32>
    %c0_10 = arith.constant 0 : index
    %c0_11 = arith.constant 0 : index
    %c0_12 = arith.constant 0 : index
    %24 = vector.load %arg5[%c0_10, %c0_11, %c0_12] : memref<1x8x32xf32, #tpu.memory_space<vmem>>, vector<1x8x32xf32>
    tpu.vector_store %arg5[%c0_10, %c0_11, %c0_12], %23 {strides = array<i32>} : memref<1x8x32xf32, #tpu.memory_space<vmem>>, vector<1x8x32xf32>,
    return
  }
  func.func @transform_0(%arg0: i32, %arg1: i32) -> (i32, i32, i32) {
    %c0_i32 = arith.constant 0 : i32
    %c0_i32_0 = arith.constant 0 : i32
    return %arg1, %c0_i32, %arg0 : i32, i32, i32
  }
  func.func @transform_1(%arg0: i32, %arg1: i32) -> (i32, i32) {
    %c0_i32 = arith.constant 0 : i32
    %c0_i32_0 = arith.constant 0 : i32
    return %c0_i32, %arg0 : i32, i32
  }
  func.func @transform_2(%arg0: i32, %arg1: i32) -> (i32, i32) {
    %c0_i32 = arith.constant 0 : i32
    %c0_i32_0 = arith.constant 0 : i32
    return %c0_i32, %arg0 : i32, i32
  }
  func.func @transform_3(%arg0: i32, %arg1: i32) -> (i32, i32, i32) {
    %c0_i32 = arith.constant 0 : i32
    %c0_i32_0 = arith.constant 0 : i32
    return %arg1, %c0_i32, %arg0 : i32, i32, i32
  }
}

</mosaic_0001>

<llo_original>
// kernel: tpu_custom_call.1
$region0: #{tpu_custom_call.1}
  #allocation0 [shape = 'u32[]', space=smem, size = 0x4, offset = 0x4, fixed_abs, tag = 'smem constant byte address 0x4 - core index']
  #allocation1 [shape = 'u32[72,128]{1,0:T(1,128)}', space=vmem, size = 0x9000, scoped, tag = 'internal scratch']
  %s0 = inlined_call_operand.hbm [shape: f32[2,8,32], index: 0, kind: input, shape index: {}]
  %s1 = inlined_call_operand.hbm [shape: f32[1,32], index: 1, kind: input, shape index: {}]
  %s2 = inlined_call_operand.vmem [shape: f32[1,32], index: 2, kind: input, shape index: {}]
  %s3 = inlined_call_operand.hbm [shape: f32[2,8,32], index: 3, kind: output, shape index: {}]
  %s4 = sld [smem:[#allocation0]]
  $region53: #{tpu_custom_call.1} parent=0
    _
  %s6 = ssub.s32 1, %s4
  %s7 = scalar_select 0, %s6, %s4
  $region1: #{tpu_custom_call.1} parent=0
    #allocation2 [shape = 'u8[8192]{0}', space=vmem, size = 0x2000, scoped, tag = 'input window, operand 0']
    #allocation3 [shape = 's32[2]{0}', space=sflag, size = 0x8, scoped, tag = 'scoped memory for tpu_custom_call.1']
    #allocation4 [shape = 's32[2]{0}', space=sflag, size = 0x8, scoped, tag = 'scoped memory for tpu_custom_call.1']
    #allocation5 [shape = 'u8[512]{0}', space=vmem, size = 0x400, scoped, tag = 'input window, operand 1, single buffered']
    #allocation6 [shape = 's32[1]{0}', space=sflag, size = 0x4, scoped, tag = 'scoped memory for tpu_custom_call.1']
    #allocation7 [shape = 'u8[8192]{0}', space=vmem, size = 0x2000, scoped, tag = 'output window, operand 0']
    %8 = vsyncpa [#allocation3], 0
    %s9 = scalar_lea.sflag [#allocation3], 1
    %10 = vsyncpa %s9, 0
    %11 = vsyncpa [#allocation6], 0
    %12 = vsyncpa [#allocation4], 0
    %s13 = scalar_lea.sflag [#allocation4], 1
    %14 = vsyncpa %s13, 0
    loop: start=0, step=1, limit=4
    $region2: #{tpu_custom_call.1} parent=1 // loop_pre_header
      _
    $region3: #{tpu_custom_call.1} parent=1 // loop_header
      %s16 = sphi 0, %s20
      %p17 = scmp.ge.s32.totalorder %s16, 4
      %s23 = sphi 0, %s35
      %s24 = sphi 0, %s31
      %s25 = sphi 0, %s23
      %s26 = sphi 0, %s24
      %s27 = sphi 0, %s25
      %s28 = sphi 0, %s26
      %s40 = sphi 0, %s42
      %s43 = sphi 0, %s40
      %s44 = sphi 0, %s43
      %s60 = sphi 0, %s44
      %s66 = sphi 0, %s68
      %s69 = sphi 0, %s66
      %s70 = sphi 0, %s69
      %s86 = sphi 0, %s70
      %s92 = sphi 0, %s94
      %s95 = sphi 0, %s92
      %s96 = sphi 0, %s95
      %s112 = sphi 0, %s96
      %s120 = sphi 0, %s122
      %s123 = sphi 0, %s120
      %s124 = sphi 0, %s123
      %s140 = sphi 0, %s124
    $region4: #{tpu_custom_call.1} parent=1 // loop_header_branch
      %19 = sbr.rel (%p17) target = $region8
    $region5: #{tpu_custom_call.1} parent=1 // loop_body
      %s21 = ssub.s32 %s16, 1
      %s22 = ssub.s32 %s16, 2
      %s29 = sadd.s32 1, %s24
      %p30 = scmp.ge.s32.totalorder %s29, 2
      %s31 = scalar_select %p30, 0, %s29
      %s32 = sadd.s32 1, %s23
      %s33 = scalar_select %p30, %s32, %s23
      %p34 = scmp.ge.s32.totalorder %s33, 1
      %s35 = scalar_select %p34, 0, %s33
      %s36 = ssub.s32 %s24, %s31
      %s37 = ssub.s32 %s23, %s35
      %s38 = sor.u32 %s36, %s37
      %p39 = scmp.eq.s32.totalorder %s38, 0
      %s41 = sadd.s32 %s40, 1
      %s42 = scalar_select %p39, %s40, %s41
      %p45 = pneg %p39
      %p46 = scmp.eq.s32.totalorder %s16, 1
      %p47 = por %p45, %p46
      %p48 = scmp.ne.s32.totalorder %s40, %s43
      %p49 = scmp.eq.s32.totalorder %s16, 0
      %p50 = por %p48, %p49
      %p51 = scmp.ne.s32.totalorder %s40, %s43
      %p52 = scmp.eq.s32.totalorder %s21, 1
      %p53 = por %p51, %p52
      %p54 = scmp.ne.s32.totalorder %s43, %s44
      %p55 = scmp.eq.s32.totalorder %s21, 0
      %p56 = por %p54, %p55
      %p57 = scmp.ne.s32.totalorder %s43, %s44
      %p58 = scmp.eq.s32.totalorder %s22, 1
      %p59 = por %p57, %p58
      %p61 = scmp.ne.s32.totalorder %s44, %s60
      %p62 = scmp.eq.s32.totalorder %s22, 0
      %p63 = por %p61, %p62
      %s64 = ssub.s32 %s23, %s35
      %p65 = scmp.eq.s32.totalorder %s64, 0
      %s67 = sadd.s32 %s66, 1
      %s68 = scalar_select %p65, %s66, %s67
      %p71 = pneg %p65
      %p72 = scmp.eq.s32.totalorder %s16, 1
      %p73 = por %p71, %p72
      %p74 = scmp.ne.s32.totalorder %s66, %s69
      %p75 = scmp.eq.s32.totalorder %s16, 0
      %p76 = por %p74, %p75
      %p77 = scmp.ne.s32.totalorder %s66, %s69
      %p78 = scmp.eq.s32.totalorder %s21, 1
      %p79 = por %p77, %p78
      %p80 = scmp.ne.s32.totalorder %s69, %s70
      %p81 = scmp.eq.s32.totalorder %s21, 0
      %p82 = por %p80, %p81
      %p83 = scmp.ne.s32.totalorder %s69, %s70
      %p84 = scmp.eq.s32.totalorder %s22, 1
      %p85 = por %p83, %p84
      %p87 = scmp.ne.s32.totalorder %s70, %s86
      %p88 = scmp.eq.s32.totalorder %s22, 0
      %p89 = por %p87, %p88
      %s90 = ssub.s32 %s23, %s35
      %p91 = scmp.eq.s32.totalorder %s90, 0
      %s93 = sadd.s32 %s92, 1
      %s94 = scalar_select %p91, %s92, %s93
      %p97 = pneg %p91
      %p98 = scmp.eq.s32.totalorder %s16, 1
      %p99 = por %p97, %p98
      %p100 = scmp.ne.s32.totalorder %s92, %s95
      %p101 = scmp.eq.s32.totalorder %s16, 0
      %p102 = por %p100, %p101
      %p103 = scmp.ne.s32.totalorder %s92, %s95
      %p104 = scmp.eq.s32.totalorder %s21, 1
      %p105 = por %p103, %p104
      %p106 = scmp.ne.s32.totalorder %s95, %s96
      %p107 = scmp.eq.s32.totalorder %s21, 0
      %p108 = por %p106, %p107
      %p109 = scmp.ne.s32.totalorder %s95, %s96
      %p110 = scmp.eq.s32.totalorder %s22, 1
      %p111 = por %p109, %p110
      %p113 = scmp.ne.s32.totalorder %s96, %s112
      %p114 = scmp.eq.s32.totalorder %s22, 0
      %p115 = por %p113, %p114
      %s116 = ssub.s32 %s24, %s31
      %s117 = ssub.s32 %s23, %s35
      %s118 = sor.u32 %s116, %s117
      %p119 = scmp.eq.s32.totalorder %s118, 0
      %s121 = sadd.s32 %s120, 1
      %s122 = scalar_select %p119, %s120, %s121
      %p125 = pneg %p119
      %p126 = scmp.eq.s32.totalorder %s16, 1
      %p127 = por %p125, %p126
      %p128 = scmp.ne.s32.totalorder %s120, %s123
      %p129 = scmp.eq.s32.totalorder %s16, 0
      %p130 = por %p128, %p129
      %p131 = scmp.ne.s32.totalorder %s120, %s123
      %p132 = scmp.eq.s32.totalorder %s21, 1
      %p133 = por %p131, %p132
      %p134 = scmp.ne.s32.totalorder %s123, %s124
      %p135 = scmp.eq.s32.totalorder %s21, 0
      %p136 = por %p134, %p135
      %p137 = scmp.ne.s32.totalorder %s123, %s124
      %p138 = scmp.eq.s32.totalorder %s22, 1
      %p139 = por %p137, %p138
      %p141 = scmp.ne.s32.totalorder %s124, %s140
      %p142 = scmp.eq.s32.totalorder %s22, 0
      %p143 = por %p141, %p142
      %p144 = scmp.le.s32.totalorder 1, %s16
      %p145 = scmp.lt.s32.totalorder %s16, 3
      %p146 = pnand %p144, %p145
      %p147 = pneg %p146
      // Predicated region
      $region9: #{tpu_custom_call.1} parent=5 // pred_check
        _
      $region10: #{tpu_custom_call.1} parent=5 // pred_check_branch
        %149 = sbr.rel (%p146) target = $region12
      $region11: #{tpu_custom_call.1} parent=5 // pred_region
        %s150 = ssub.s32 %s16, 1
        // Predicated region
        $region13: #{tpu_custom_call.1} parent=11 // pred_check
          %p151 = pneg %p82
        $region14: #{tpu_custom_call.1} parent=11 // pred_check_branch
          %153 = sbr.rel (%p151) target = $region16
        $region15: #{tpu_custom_call.1} parent=11 // pred_region
          %155 = vsyncadd [#allocation6], 0
          %s156 = scalar_lea.hbm %s1, %s25
          %s158 = sshll.u32 %s156, 4
          %s159 = int_to_ptr.hbm [resolvable:$true] %s158
          %s160 = sshll.u32 [#allocation5], 4
          %s161 = int_to_ptr.vmem [resolvable:$true] %s160
          %163 = dma.hbm_to_vmem [thread:$0]  %s159, 16, %s161, [#allocation6]
        $region16: #{tpu_custom_call.1} parent=11 // pred_fallthru
          _
        // Predicated region
        $region17: #{tpu_custom_call.1} parent=11 // pred_check
          %p164 = pneg %p108
        $region18: #{tpu_custom_call.1} parent=11 // pred_check_branch
          %166 = sbr.rel (%p164) target = $region20
        $region19: #{tpu_custom_call.1} parent=11 // pred_region
          %p167 = scmp.lt.s32.totalorder %s25, 0
          %s168 = scalar_select %p167, %s25, 0
          %s169 = scalar_lea.vmem %s2, %s168
        $region20: #{tpu_custom_call.1} parent=11 // pred_fallthru
          _
      $region12: #{tpu_custom_call.1} parent=5 // pred_fallthru
        _
      %p170 = scmp.lt.s32.totalorder %s16, 2
      // Predicated region
      $region21: #{tpu_custom_call.1} parent=5 // pred_check
        %p171 = pneg %p170
      $region22: #{tpu_custom_call.1} parent=5 // pred_check_branch
        %173 = sbr.rel (%p171) target = $region24
      $region23: #{tpu_custom_call.1} parent=5 // pred_region
        // Predicated region
        $region25: #{tpu_custom_call.1} parent=23 // pred_check
          %p174 = pneg %p50
        $region26: #{tpu_custom_call.1} parent=23 // pred_check_branch
          %176 = sbr.rel (%p174) target = $region28
        $region27: #{tpu_custom_call.1} parent=23 // pred_region
          %s177 = sand.u32 %s40, 1
          %s178 = scalar_lea.sflag [#allocation3], %s177
          %s179 = sand.u32 %s40, 1
          %s180 = smul.addr %s179, 8
          %s181 = scalar_lea.vmem [#allocation2], %s180
          %183 = vsyncadd %s178, 0
          %s184 = sadd.s32 %s23, %s24
          %s185 = smul.addr %s184, 8
          %s186 = scalar_lea.hbm %s0, %s185
          %s188 = sshll.u32 %s186, 4
          %s189 = int_to_ptr.hbm [resolvable:$true] %s188
          %s190 = sshll.u32 %s181, 4
          %s191 = int_to_ptr.vmem [resolvable:$true] %s190
          %193 = dma.hbm_to_vmem [thread:$0]  %s189, 128, %s191, %s178
        $region28: #{tpu_custom_call.1} parent=23 // pred_fallthru
          _
      $region24: #{tpu_custom_call.1} parent=5 // pred_fallthru
        _
      %p194 = scmp.le.s32.totalorder 1, %s16
      %p195 = scmp.lt.s32.totalorder %s16, 3
      %p196 = pnand %p194, %p195
      %p197 = pneg %p196
      // Predicated region
      $region29: #{tpu_custom_call.1} parent=5 // pred_check
        _
      $region30: #{tpu_custom_call.1} parent=5 // pred_check_branch
        %199 = sbr.rel (%p196) target = $region32
      $region31: #{tpu_custom_call.1} parent=5 // pred_region
        %s200 = ssub.s32 %s16, 1
        %s201 = sand.u32 %s43, 1
        %s202 = scalar_lea.sflag [#allocation3], %s201
        %s203 = sand.u32 %s43, 1
        %s204 = smul.addr %s203, 8
        %s205 = scalar_lea.vmem [#allocation2], %s204
        // Predicated region
        $region33: #{tpu_custom_call.1} parent=31 // pred_check
          %p206 = pneg %p56
        $region34: #{tpu_custom_call.1} parent=31 // pred_check_branch
          %208 = sbr.rel (%p206) target = $region36
        $region35: #{tpu_custom_call.1} parent=31 // pred_region
          %210 = dma.done %s202, 128
        $region36: #{tpu_custom_call.1} parent=31 // pred_fallthru
          _
        // Predicated region
        $region37: #{tpu_custom_call.1} parent=31 // pred_check
          %p211 = pneg %p82
        $region38: #{tpu_custom_call.1} parent=31 // pred_check_branch
          %213 = sbr.rel (%p211) target = $region40
        $region39: #{tpu_custom_call.1} parent=31 // pred_region
          %215 = dma.done [#allocation6], 16
        $region40: #{tpu_custom_call.1} parent=31 // pred_fallthru
          _
        %s216 = sand.u32 %s43, 1
        %s217 = scalar_lea.sflag [#allocation3], %s216
        %s218 = sand.u32 %s43, 1
        %s219 = smul.addr %s218, 8
        %s220 = scalar_lea.vmem [#allocation2], %s219
        %p221 = pneg %p56
        %p222 = pneg %p53
        %p223 = pneg %p82
        %p224 = pneg %p79
        %p225 = scmp.lt.s32.totalorder %s25, 0
        %s226 = scalar_select %p225, %s25, 0
        %s227 = scalar_lea.vmem %s2, %s226
        %p228 = pneg %p108
        %p229 = pneg %p105
        %p230 = pneg %p136
        %p231 = pneg %p133
        %s232 = sand.u32 %s123, 1
        %s233 = scalar_lea.sflag [#allocation4], %s232
        %s234 = sand.u32 %s123, 1
        %s235 = smul.addr %s234, 8
        %s236 = scalar_lea.vmem [#allocation7], %s235
        %p237 = scmp.lt.s32.totalorder %s25, 0
        %s238 = scalar_select %p237, %s25, 0
        %s239 = scalar_lea.vmem %s2, %s238
        %v240 = vld [vmem:[%s205] sm:$0xff]
        %vm241 = vcmask 261120
        %v242 = vsel %vm241, %v240, 0.0
        %v243 = vrot.slane %v242, 4
        %v244 = vadd.f32 %v242, %v243
        %v245 = vrot.slane %v244, 2
        %v246 = vadd.f32 %v244, %v245
        %v247 = vrot.slane %v246, 1
        %v248 = vadd.f32 %v246, %v247
        %v249 = vmul.f32 %v248, 0.125
        %v250 = vsub.f32 %v240, %v249
        %v251 = vmul.f32 %v250, %v250
        %v252 = vsel %vm241, %v251, 0.0
        %v253 = vrot.slane %v252, 4
        %v254 = vadd.f32 %v252, %v253
        %v255 = vrot.slane %v254, 2
        %v256 = vadd.f32 %v254, %v255
        %v257 = vrot.slane %v256, 1
        %v258 = vadd.f32 %v256, %v257
        %v259 = vmul.f32 %v258, 0.125
        %v260 = vadd.f32 %v259, 1e-05
        %v261 = vrsqrt.pop %v260
        %v262 = vmul.f32 %v261, %v260
        %v263 = vmul.f32 %v262, %v261
        %v264 = vmul.f32 0.5, %v263
        %v265 = vsub.f32 1.5, %v264
        %v266 = vmul.f32 %v261, %v265
        %vm267 = vweird.f32 %v260
        %vm268 = vweird.f32 %v261
        %vm269 = vmor %vm267, %vm268
        %v270 = vsel %vm269, %v261, %v266
        %v271 = vld [vmem:[#allocation5] sm:$0x1]
        %v272 = vld [vmem:[%s239] sm:$0x1]
        %v273 = vmul.f32 %v270, %v271
        %v274 = vperm.slane %v273, 0
        %v275 = vmul.f32 %v250, %v274
        %v277 = vperm.slane %v272, 0
        %v279 = vadd.f32 %v275, %v277
        %280 = vst.msk [vmem:[%s236] sm:$0xff] %vm241, %v279
        %s281 = sand.u32 %s123, 1
        %s282 = scalar_lea.sflag [#allocation4], %s281
        %s283 = sand.u32 %s123, 1
        %s284 = smul.addr %s283, 8
        %s285 = scalar_lea.vmem [#allocation7], %s284
        // Predicated region
        $region41: #{tpu_custom_call.1} parent=31 // pred_check
          %p286 = pneg %p133
        $region42: #{tpu_custom_call.1} parent=31 // pred_check_branch
          %288 = sbr.rel (%p286) target = $region44
        $region43: #{tpu_custom_call.1} parent=31 // pred_region
          %290 = vsyncadd %s282, 0
          %s291 = sadd.s32 %s25, %s26
          %s292 = smul.addr %s291, 8
          %s293 = scalar_lea.hbm %s3, %s292
          %s295 = sshll.u32 %s285, 4
          %s296 = int_to_ptr.vmem [resolvable:$true] %s295
          %s297 = sshll.u32 %s293, 4
          %s298 = int_to_ptr.hbm [resolvable:$true] %s297
          %300 = dma.vmem_to_hbm [thread:$0]  %s296, 128, %s298, %s282
        $region44: #{tpu_custom_call.1} parent=31 // pred_fallthru
          _
      $region32: #{tpu_custom_call.1} parent=5 // pred_fallthru
        _
      %p301 = scmp.le.s32.totalorder 2, %s16
      // Predicated region
      $region45: #{tpu_custom_call.1} parent=5 // pred_check
        %p302 = pneg %p301
      $region46: #{tpu_custom_call.1} parent=5 // pred_check_branch
        %304 = sbr.rel (%p302) target = $region48
      $region47: #{tpu_custom_call.1} parent=5 // pred_region
        %s305 = ssub.s32 %s16, 2
        // Predicated region
        $region49: #{tpu_custom_call.1} parent=47 // pred_check
          %p306 = pneg %p139
        $region50: #{tpu_custom_call.1} parent=47 // pred_check_branch
          %308 = sbr.rel (%p306) target = $region52
        $region51: #{tpu_custom_call.1} parent=47 // pred_region
          %s309 = sand.u32 %s124, 1
          %s310 = scalar_lea.sflag [#allocation4], %s309
          %s311 = sand.u32 %s124, 1
          %s312 = smul.addr %s311, 8
          %s313 = scalar_lea.vmem [#allocation7], %s312
          %315 = dma.done %s310, 128
        $region52: #{tpu_custom_call.1} parent=47 // pred_fallthru
          _
      $region48: #{tpu_custom_call.1} parent=5 // pred_fallthru
        _
    $region6: #{tpu_custom_call.1} parent=1 // loop_footer
      %s20 = sadd.s32 1, %s16
    $region7: #{tpu_custom_call.1} parent=1 // loop_footer_branch
      %15 = sbr.rel target = $region3
    $region8: #{tpu_custom_call.1} parent=1 // loop_exit
      _
    %316 = vsyncpa [#allocation3], 1
    %s317 = scalar_lea.sflag [#allocation3], 1
    %318 = vsyncpa %s317, 1
    %319 = vsyncpa [#allocation6], 1
    %320 = vsyncpa [#allocation4], 1
    %s321 = scalar_lea.sflag [#allocation4], 1
    %322 = vsyncpa %s321, 1

</llo_original>
